<compile_context>
chip_gen: v7x
topology: tpu7x:2x2x1
jax: 0.10.0
libtpu: 0.0.40
codegen_flags: <defaults>
</compile_context>

<pallas_src>
import functools

import jax
import jax.numpy as jnp
from jax import lax
from jax.experimental import pallas as pl
from jax.experimental.pallas import tpu as pltpu


def _round_up(a: int, b: int) -> int:
    return (a + b - 1) // b * b


def _physical_vmem_bytes() -> int:
    """Per-TensorCore VMEM capacity; conservative fallback = v7x (64 MiB)."""
    try:
        return int(pltpu.get_tpu_info().vmem_capacity_bytes)
    except Exception:
        return 64 * 1024 * 1024


def _qkv_proj_kernel(x_ref, w_ref, q_ref, k_ref, v_ref, *, dp):
    """One row tile of the fused QKV projection.

    x_ref : (tq, d_in)  f32 input rows
    w_ref : (d_in, 3*dp) f32 fused [Wq*scale | Wk | Wv]  (constant index map)
    q/k/v_ref : (tq, dp) mxu_dtype outputs (Q already scaled by 1/sqrt(d_k))
    """
    qkv = jnp.dot(x_ref[...], w_ref[...], preferred_element_type=jnp.float32)
    q_ref[...] = qkv[:, 0 * dp:1 * dp].astype(q_ref.dtype)
    k_ref[...] = qkv[:, 1 * dp:2 * dp].astype(k_ref.dtype)
    v_ref[...] = qkv[:, 2 * dp:3 * dp].astype(v_ref.dtype)


def _attn_kernel(q_ref, k_ref, v_ref, ctx_ref, attn_ref, *, s, s_pad):
    """One tq-row tile of attention.  No cross-step state -> "parallel" grid.

    q_ref   : (tq, dp)     mxu_dtype query tile (pre-scaled)
    k_ref   : (s_pad, dp)  mxu_dtype keys, resident (constant index map)
    v_ref   : (s_pad, dp)  mxu_dtype values, resident
    ctx_ref : (tq, dp)     f32 context tile (lane-dense)
    attn_ref: (tq, s_pad)  attention-weights tile (f32 or bf16)
    """
    # scores = q @ k.T without materializing the transpose (MXU-direct),
    # bf16 operands, f32 accumulation.
    scores = lax.dot_general(q_ref[...], k_ref[...],
                             (((1,), (1,)), ((), ())),
                             preferred_element_type=jnp.float32)

    if s_pad != s:  # static: mask zero-padded key columns out of the softmax
        col = lax.broadcasted_iota(jnp.int32, (1, s_pad), 1)
        scores = jnp.where(col < s, scores, -jnp.inf)

    # Numerically-stable softmax along the key axis, all-f32 elementwise.
    m = jnp.max(scores, axis=-1, keepdims=True)
    scores = jnp.exp(scores - m)                      # reuse scores storage
    denom = jnp.sum(scores, axis=-1, keepdims=True)
    attn = scores * pl.reciprocal(denom, approx=True)  # EUP slot

    # Write attention weights immediately (keeps live (tq, s_pad) f32
    # temporaries to a minimum), then feed the MXU bf16 operands.
    attn_ref[...] = attn.astype(attn_ref.dtype)
    ctx_ref[...] = jnp.dot(attn.astype(v_ref.dtype), v_ref[...],
                           preferred_element_type=jnp.float32
                           ).astype(ctx_ref.dtype)


def self_attention_v2(x, w_query, w_key, w_value, *, block_q=None,
                      mxu_dtype=jnp.bfloat16, attn_dtype=jnp.float32):
    """x: (S, d_in); w_*: (d_out, d_in) as in nn.Linear.weight (qkv_bias=False).

    Returns (context_vec (S, d_out) f32, attn_weights (S, S) attn_dtype),
    matching SelfAttention_v2.forward / .get_attn_weights().
    """
    s, d_in = x.shape
    d_out = w_query.shape[0]

    dp = _round_up(d_out, 128)                  # lane-dense head dim
    s8 = _round_up(s, 8)
    if block_q is None:
        block_q = 256 if s8 <= 1024 else 128    # smaller tiles for long S (v7x VMEM)
    block_q = _round_up(block_q, 8)
    tq = min(block_q, s8)                       # query tile rows (multiple of 8)
    s_pad = _round_up(s, tq)
    n_tiles = s_pad // tq

    f32 = jnp.float32
    scale = 1.0 / (d_out ** 0.5)                # folded into Wq (f32, pre-projection)

    # Fused, zero-padded [Wq*scale | Wk | Wv] with 128-aligned segments (f32).
    w_qkv = jnp.zeros((d_in, 3 * dp), f32)
    w_qkv = w_qkv.at[:, 0:d_out].set(w_query.T.astype(f32) * scale)
    w_qkv = w_qkv.at[:, dp:dp + d_out].set(w_key.T.astype(f32))
    w_qkv = w_qkv.at[:, 2 * dp:2 * dp + d_out].set(w_value.T.astype(f32))

    x_p = x.astype(f32)
    if s_pad != s:
        x_p = jnp.pad(x_p, ((0, s_pad - s), (0, 0)))

    vmem_cap = int(0.9 * _physical_vmem_bytes())
    mxu_b = jnp.dtype(mxu_dtype).itemsize
    attn_b = jnp.dtype(attn_dtype).itemsize

    # ------------------------------------------------------------------
    # 1) Fused QKV projection: its own "parallel" grid over row tiles.
    # ------------------------------------------------------------------
    proj_need = (2 * tq * d_in * 4              # x tile, double-buffered
                 + 2 * d_in * 3 * dp * 4        # fused W (constant index map)
                 + 3 * 2 * tq * dp * mxu_b      # q/k/v output tiles
                 + 2 * tq * 3 * dp * 4)         # f32 dot-result temporary
    proj_vmem = min(vmem_cap, max(32 * 1024 * 1024, 2 * proj_need))

    q_s, k_s, v_s = pl.pallas_call(
        functools.partial(_qkv_proj_kernel, dp=dp),
        out_shape=(
            jax.ShapeDtypeStruct((s_pad, dp), mxu_dtype),
            jax.ShapeDtypeStruct((s_pad, dp), mxu_dtype),
            jax.ShapeDtypeStruct((s_pad, dp), mxu_dtype),
        ),
        grid_spec=pltpu.PrefetchScalarGridSpec(
            num_scalar_prefetch=0,
            grid=(n_tiles,),
            in_specs=[
                pl.BlockSpec((tq, d_in), lambda i: (i, 0)),       # x row tile
                pl.BlockSpec((d_in, 3 * dp), lambda i: (0, 0)),   # fused W (resident)
            ],
            out_specs=(
                pl.BlockSpec((tq, dp), lambda i: (i, 0)),
                pl.BlockSpec((tq, dp), lambda i: (i, 0)),
                pl.BlockSpec((tq, dp), lambda i: (i, 0)),
            ),
        ),
        compiler_params=pltpu.CompilerParams(
            dimension_semantics=("parallel",),
            vmem_limit_bytes=proj_vmem,
        ),
    )(x_p, w_qkv)

    # ------------------------------------------------------------------
    # 2) Attention: grid over query-row tiles, K/V resident, no cross-step
    #    state -> fully parallel (megacore-shardable on v7x).
    # ------------------------------------------------------------------
    attn_need = (2 * tq * dp * mxu_b            # Q tile, double-buffered
                 + 2 * 2 * s_pad * dp * mxu_b   # K + V resident (2 buffers each)
                 + 2 * tq * dp * 4              # ctx output tile
                 + 2 * tq * s_pad * attn_b      # attn output tile
                 + 3 * tq * s_pad * 4)          # f32 softmax temporaries
    attn_vmem = min(vmem_cap, max(32 * 1024 * 1024, int(1.5 * attn_need)))

    ctx_p, attn_p = pl.pallas_call(
        functools.partial(_attn_kernel, s=s, s_pad=s_pad),
        out_shape=(
            jax.ShapeDtypeStruct((s_pad, dp), jnp.float32),
            jax.ShapeDtypeStruct((s_pad, s_pad), attn_dtype),
        ),
        grid_spec=pltpu.PrefetchScalarGridSpec(
            num_scalar_prefetch=0,
            grid=(n_tiles,),
            in_specs=[
                pl.BlockSpec((tq, dp), lambda i: (i, 0)),        # Q tile
                pl.BlockSpec((s_pad, dp), lambda i: (0, 0)),     # K resident
                pl.BlockSpec((s_pad, dp), lambda i: (0, 0)),     # V resident
            ],
            out_specs=(
                pl.BlockSpec((tq, dp), lambda i: (i, 0)),        # ctx tile
                pl.BlockSpec((tq, s_pad), lambda i: (i, 0)),     # attn tile
            ),
        ),
        compiler_params=pltpu.CompilerParams(
            dimension_semantics=("parallel",),
            vmem_limit_bytes=attn_vmem,
        ),
    )(q_s, k_s, v_s)

    return ctx_p[:s, :d_out], attn_p[:s, :s]


def _reference(x, w_query, w_key, w_value):
    q = x @ w_query.T
    k = x @ w_key.T
    v = x @ w_value.T
    scores = q @ k.T / jnp.sqrt(jnp.float32(k.shape[-1]))
    attn = jax.nn.softmax(scores, axis=-1)
    return attn @ v, attn


if __name__ == "__main__":
    key = jax.random.PRNGKey(0)

    # --- test 1: un-batched (seq, d_in) shapes from the module, default
    #     bf16-at-MXU policy --------------------------------------------
    S, d_in, d_out = 8, 32, 32
    kx, kq, kk, kv = jax.random.split(key, 4)
    x = jax.random.normal(kx, (S, d_in), dtype=jnp.float32)
    w_query = jax.random.normal(kq, (d_out, d_in), dtype=jnp.float32) * 0.1
    w_key = jax.random.normal(kk, (d_out, d_in), dtype=jnp.float32) * 0.1
    w_value = jax.random.normal(kv, (d_out, d_in), dtype=jnp.float32) * 0.1

    ctx, attn = self_attention_v2(x, w_query, w_key, w_value)
    jax.block_until_ready((ctx, attn))
    ref_ctx, ref_attn = _reference(x, w_query, w_key, w_value)
    assert ctx.shape == (S, d_out) and attn.shape == (S, S)
    assert jnp.allclose(ctx, ref_ctx, atol=2e-2, rtol=2e-2)
    assert jnp.allclose(attn.astype(jnp.float32), ref_attn, atol=2e-2, rtol=2e-2)

    # --- test 2: ragged shapes exercising padding, key-masking, a multi-tile
    #     parallel grid (block_q=8 -> 3 q-tiles, 4 padded key columns) and
    #     the bf16 attention-weights output path -------------------------
    S2, d_in2, d_out2 = 20, 16, 24
    kx2, kq2, kk2, kv2 = jax.random.split(jax.random.PRNGKey(1), 4)
    x2 = jax.random.normal(kx2, (S2, d_in2), dtype=jnp.float32)
    wq2 = jax.random.normal(kq2, (d_out2, d_in2), dtype=jnp.float32) * 0.1
    wk2 = jax.random.normal(kk2, (d_out2, d_in2), dtype=jnp.float32) * 0.1
    wv2 = jax.random.normal(kv2, (d_out2, d_in2), dtype=jnp.float32) * 0.1

    ctx2, attn2 = self_attention_v2(x2, wq2, wk2, wv2, block_q=8,
                                    attn_dtype=jnp.bfloat16)
    jax.block_until_ready((ctx2, attn2))
    ref_ctx2, ref_attn2 = _reference(x2, wq2, wk2, wv2)
    assert ctx2.shape == (S2, d_out2) and attn2.shape == (S2, S2)
    assert jnp.allclose(ctx2, ref_ctx2, atol=2e-2, rtol=2e-2)
    assert jnp.allclose(attn2.astype(jnp.float32), ref_attn2, atol=2e-2, rtol=2e-2)

    # --- test 3: f32-MXU path for tight parity with the reference --------
    ctx3, attn3 = self_attention_v2(x2, wq2, wk2, wv2, block_q=8,
                                    mxu_dtype=jnp.float32)
    jax.block_until_ready((ctx3, attn3))
    assert jnp.allclose(ctx3, ref_ctx2, atol=2e-3, rtol=2e-3)
    assert jnp.allclose(attn3, ref_attn2, atol=2e-3, rtol=2e-3)

    print("KERNEL_OK")
</pallas_src>

<mosaic_0001>
module attributes {stable_mosaic.version = 11 : i64} {
  func.func @_qkv_proj_kernel(%arg0: i32, %arg1: memref<8x32xf32, #tpu.memory_space<vmem>>, %arg2: memref<32x384xf32, #tpu.memory_space<vmem>>, %arg3: memref<8x128xbf16, #tpu.memory_space<vmem>>, %arg4: memref<8x128xbf16, #tpu.memory_space<vmem>>, %arg5: memref<8x128xbf16, #tpu.memory_space<vmem>>) attributes {dimension_semantics = [#tpu.dimension_semantics<parallel>], iteration_bounds = array<i64: 1>, scalar_prefetch = 0 : i64, scratch_operands = 0 : i64, tpu.core_type = #tpu.core_type<tc>, window_params = [{transform_indices = @transform_0, window_bounds = array<i64: 8, 32>}, {pipeline_mode = #tpu.pipeline_mode<synchronous>, transform_indices = @transform_1, window_bounds = array<i64: 32, 384>}, {transform_indices = @transform_2, window_bounds = array<i64: 8, 128>}, {transform_indices = @transform_3, window_bounds = array<i64: 8, 128>}, {transform_indices = @transform_4, window_bounds = array<i64: 8, 128>}]} {
    %c0 = arith.constant 0 : index
    %c0_0 = arith.constant 0 : index
    %0 = vector.load %arg1[%c0, %c0_0] : memref<8x32xf32, #tpu.memory_space<vmem>>, vector<8x32xf32>
    %c0_1 = arith.constant 0 : index
    %c0_2 = arith.constant 0 : index
    %1 = vector.load %arg2[%c0_1, %c0_2] : memref<32x384xf32, #tpu.memory_space<vmem>>, vector<32x384xf32>
    %cst = arith.constant dense<0.000000e+00> : vector<8x384xf32>
    %2 = tpu.matmul %0, %1, %cst {dimension_numbers = #tpu.dot_dimension_numbers<[1], [0], [0], [1], [0, 0, 1, 1], [], []>} : vector<8x32xf32>, vector<32x384xf32>, vector<8x384xf32> -> vector<8x384xf32>
    %3 = vector.extract_strided_slice %2 {offsets = [0, 0], sizes = [8, 128], strides = [1, 1]} : vector<8x384xf32> to vector<8x128xf32>
    %4 = arith.truncf %3 : vector<8x128xf32> to vector<8x128xbf16>
    %c0_3 = arith.constant 0 : index
    %c0_4 = arith.constant 0 : index
    %5 = vector.load %arg3[%c0_3, %c0_4] : memref<8x128xbf16, #tpu.memory_space<vmem>>, vector<8x128xbf16>
    tpu.vector_store %arg3[%c0_3, %c0_4], %4 {strides = array<i32>} : memref<8x128xbf16, #tpu.memory_space<vmem>>, vector<8x128xbf16>,
    %6 = vector.extract_strided_slice %2 {offsets = [0, 128], sizes = [8, 128], strides = [1, 1]} : vector<8x384xf32> to vector<8x128xf32>
    %7 = arith.truncf %6 : vector<8x128xf32> to vector<8x128xbf16>
    %c0_5 = arith.constant 0 : index
    %c0_6 = arith.constant 0 : index
    %8 = vector.load %arg4[%c0_5, %c0_6] : memref<8x128xbf16, #tpu.memory_space<vmem>>, vector<8x128xbf16>
    tpu.vector_store %arg4[%c0_5, %c0_6], %7 {strides = array<i32>} : memref<8x128xbf16, #tpu.memory_space<vmem>>, vector<8x128xbf16>,
    %9 = vector.extract_strided_slice %2 {offsets = [0, 256], sizes = [8, 128], strides = [1, 1]} : vector<8x384xf32> to vector<8x128xf32>
    %10 = arith.truncf %9 : vector<8x128xf32> to vector<8x128xbf16>
    %c0_7 = arith.constant 0 : index
    %c0_8 = arith.constant 0 : index
    %11 = vector.load %arg5[%c0_7, %c0_8] : memref<8x128xbf16, #tpu.memory_space<vmem>>, vector<8x128xbf16>
    tpu.vector_store %arg5[%c0_7, %c0_8], %10 {strides = array<i32>} : memref<8x128xbf16, #tpu.memory_space<vmem>>, vector<8x128xbf16>,
    return
  }
  func.func @transform_0(%arg0: i32) -> (i32, i32) {
    %c0_i32 = arith.constant 0 : i32
    %c0_i32_0 = arith.constant 0 : i32
    return %arg0, %c0_i32 : i32, i32
  }
  func.func @transform_1(%arg0: i32) -> (i32, i32) {
    %c0_i32 = arith.constant 0 : i32
    %c0_i32_0 = arith.constant 0 : i32
    %c0_i32_1 = arith.constant 0 : i32
    return %c0_i32, %c0_i32_0 : i32, i32
  }
  func.func @transform_2(%arg0: i32) -> (i32, i32) {
    %c0_i32 = arith.constant 0 : i32
    %c0_i32_0 = arith.constant 0 : i32
    return %arg0, %c0_i32 : i32, i32
  }
  func.func @transform_3(%arg0: i32) -> (i32, i32) {
    %c0_i32 = arith.constant 0 : i32
    %c0_i32_0 = arith.constant 0 : i32
    return %arg0, %c0_i32 : i32, i32
  }
  func.func @transform_4(%arg0: i32) -> (i32, i32) {
    %c0_i32 = arith.constant 0 : i32
    %c0_i32_0 = arith.constant 0 : i32
    return %arg0, %c0_i32 : i32, i32
  }
}

</mosaic_0001>

<llo_original>
// kernel: tpu_custom_call.1
$region0: #{tpu_custom_call.1}
  #allocation0 [shape = 'u32[]', space=smem, size = 0x4, offset = 0x4, fixed_abs, tag = 'smem constant byte address 0x4 - core index']
  #allocation1 [shape = 'u32[144,128]{1,0:T(1,128)}', space=vmem, size = 0x12000, scoped, tag = 'internal scratch']
  %s0 = inlined_call_operand.hbm [shape: f32[8,32], index: 0, kind: input, shape index: {}]
  %s1 = inlined_call_operand.hbm [shape: f32[32,384], index: 1, kind: input, shape index: {}]
  %s2 = inlined_call_operand.hbm [shape: bf16[8,128], index: 2, kind: output, shape index: {0}]
  %s3 = inlined_call_operand.hbm [shape: bf16[8,128], index: 3, kind: output, shape index: {1}]
  %s4 = inlined_call_operand.hbm [shape: bf16[8,128], index: 4, kind: output, shape index: {2}]
  %5 = xla_tuple %s2, %s3, %s4
  %s6 = sld [smem:[#allocation0]]
  $region42: #{tpu_custom_call.1} parent=0
    _
  %s8 = ssub.s32 1, %s6
  %s9 = scalar_select 0, %s8, %s6
  $region1: #{tpu_custom_call.1} parent=0
    #allocation2 [shape = 'u8[4096]{0}', space=vmem, size = 0x1000, scoped, tag = 'input window, operand 0, single buffered']
    #allocation3 [shape = 's32[1]{0}', space=sflag, size = 0x4, scoped, tag = 'scoped memory for tpu_custom_call.1']
    #allocation4 [shape = 's32[1]{0}', space=sflag, size = 0x4, scoped, tag = 'scoped memory for tpu_custom_call.1']
    #allocation5 [shape = 'u8[49152]{0}', space=vmem, size = 0xc000, scoped, tag = 'input window, operand 1, single buffered']
    #allocation6 [shape = 's32[1]{0}', space=sflag, size = 0x4, scoped, tag = 'scoped memory for tpu_custom_call.1']
    #allocation7 [shape = 'u8[2048]{0}', space=vmem, size = 0x800, scoped, tag = 'output window, operand 0, single buffered']
    #allocation8 [shape = 'u8[2048]{0}', space=vmem, size = 0x800, scoped, tag = 'output window, operand 1, single buffered']
    #allocation9 [shape = 's32[1]{0}', space=sflag, size = 0x4, scoped, tag = 'scoped memory for tpu_custom_call.1']
    #allocation10 [shape = 'u8[2048]{0}', space=vmem, size = 0x800, scoped, tag = 'output window, operand 2, single buffered']
    %10 = vsyncpa [#allocation3], 0
    %11 = vsyncpa [#allocation6], 0
    %12 = vsyncpa [#allocation4], 0
    %13 = vsyncpa [#allocation9], 0
    // Predicated region
    $region2: #{tpu_custom_call.1} parent=1 // pred_check
      _
    $region3: #{tpu_custom_call.1} parent=1 // pred_check_branch
      %15 = sbr.rel (0) target = $region5
    $region4: #{tpu_custom_call.1} parent=1 // pred_region
      %s17 = ssub.s32 128, 128
      %18 = vsyncadd [#allocation3], %s17
      %s20 = sshll.u32 [#allocation2], 4
      %s21 = int_to_ptr.vmem [resolvable:$true] %s20
      %23 = dma.hbm_to_vmem [thread:$0]  %s0, 128, %s21, [#allocation3]
    $region5: #{tpu_custom_call.1} parent=1 // pred_fallthru
      _
    // Predicated region
    $region6: #{tpu_custom_call.1} parent=1 // pred_check
      _
    $region7: #{tpu_custom_call.1} parent=1 // pred_check_branch
      %25 = sbr.rel (0) target = $region9
    $region8: #{tpu_custom_call.1} parent=1 // pred_region
      %s27 = ssub.s32 1536, 1536
      %28 = vsyncadd [#allocation6], %s27
      %s29 = sshll.u32 [#allocation5], 4
      %s30 = int_to_ptr.vmem [resolvable:$true] %s29
      %35 = dma.hbm_to_vmem [thread:$0]  %s1, 1536, %s30, [#allocation6], 384, 384, 24
    $region9: #{tpu_custom_call.1} parent=1 // pred_fallthru
      _
    // Predicated region
    $region10: #{tpu_custom_call.1} parent=1 // pred_check
      _
    $region11: #{tpu_custom_call.1} parent=1 // pred_check_branch
      %37 = sbr.rel (0) target = $region13
    $region12: #{tpu_custom_call.1} parent=1 // pred_region
      %38 = dma.done [#allocation3], 128
    $region13: #{tpu_custom_call.1} parent=1 // pred_fallthru
      _
    // Predicated region
    $region14: #{tpu_custom_call.1} parent=1 // pred_check
      _
    $region15: #{tpu_custom_call.1} parent=1 // pred_check_branch
      %40 = sbr.rel (0) target = $region17
    $region16: #{tpu_custom_call.1} parent=1 // pred_region
      %41 = dma.done [#allocation6], 1536
    $region17: #{tpu_custom_call.1} parent=1 // pred_fallthru
      _
    %v42 = vld [vmem:[#allocation2] sm:$0xff]
    %v43 = vld [vmem:[#allocation5] sm:$0xff]
    %v44 = vld [vmem:[#allocation5 + $0x8] sm:$0xff]
    %v45 = vld [vmem:[#allocation5 + $0x10] sm:$0xff]
    %v46 = vld [vmem:[#allocation5 + $0x18] sm:$0xff]
    %v47 = vld [vmem:[#allocation5 + $0x20] sm:$0xff]
    %v48 = vld [vmem:[#allocation5 + $0x28] sm:$0xff]
    %v49 = vld [vmem:[#allocation5 + $0x30] sm:$0xff]
    %v50 = vld [vmem:[#allocation5 + $0x38] sm:$0xff]
    %v51 = vld [vmem:[#allocation5 + $0x40] sm:$0xff]
    %v52 = vld [vmem:[#allocation5 + $0x48] sm:$0xff]
    %v53 = vld [vmem:[#allocation5 + $0x50] sm:$0xff]
    %v54 = vld [vmem:[#allocation5 + $0x58] sm:$0xff]
    %vm55 = vcmask 261120
    %v57 = vsel %vm55, %v42, 0
    %59 = vmatprep.subr.mxu0 %v44
    %60 = vmatpush1.msra.mxu0 %v43
    %61 = vmatprep.subr.mxu0 %v47
    %62 = vmatpush1.msra.mxu0 %v46
    %63 = vmatprep.subr.mxu0 %v50
    %64 = vmatpush1.msra.mxu0 %v49
    %65 = vmatprep.subr.mxu0 %v53
    %66 = vmatpush1.msra.mxu0 %v52
    %67 = vmatprep.subr.mxu0 0.0
    %68 = vmatpush1.msra.mxu0 0.0
    %69 = vmatprep.subr.mxu0 0.0
    %70 = vmatpush1.msra.mxu0 0.0
    %71 = vmatprep.subr.mxu0 0.0
    %72 = vmatpush1.msra.mxu0 0.0
    %73 = vmatprep.subr.mxu0 0.0
    %74 = vmatpush1.msra.mxu0 0.0
    %75 = vmatprep.subr.mxu0 0.0
    %76 = vmatpush1.msra.mxu0 0.0
    %77 = vmatprep.subr.mxu0 0.0
    %78 = vmatpush1.msra.mxu0 0.0
    %79 = vmatprep.subr.mxu0 0.0
    %80 = vmatpush1.msra.mxu0 0.0
    %81 = vmatprep.subr.mxu0 0.0
    %82 = vmatpush1.msra.mxu0 0.0
    %83 = vmatprep.subr.mxu0 0.0
    %84 = vmatpush1.msra.mxu0 0.0
    %85 = vmatprep.subr.mxu0 0.0
    %86 = vmatpush1.msra.mxu0 0.0
    %87 = vmatprep.subr.mxu0 0.0
    %88 = vmatpush1.msra.mxu0 0.0
    %89 = vmatprep.subr.mxu0 0.0
    %90 = vmatpush1.msra.mxu0 0.0
    %91 = vmatprep.subr.mxu0 0.0
    %92 = vmatpush1.msra.mxu0 0.0
    %93 = vmatprep.subr.mxu0 0.0
    %94 = vmatpush1.msra.mxu0 0.0
    %95 = vmatprep.subr.mxu0 0.0
    %96 = vmatpush1.msra.mxu0 0.0
    %97 = vmatprep.subr.mxu0 0.0
    %98 = vmatpush1.msra.mxu0 0.0
    %99 = vmatprep.subr.mxu0 0.0
    %100 = vmatpush1.msra.mxu0 0.0
    %101 = vmatprep.subr.mxu0 0.0
    %102 = vmatpush1.msra.mxu0 0.0
    %103 = vmatprep.subr.mxu0 0.0
    %104 = vmatpush1.msra.mxu0 0.0
    %105 = vmatprep.subr.mxu0 0.0
    %106 = vmatpush1.msra.mxu0 0.0
    %107 = vmatprep.subr.mxu0 0.0
    %108 = vmatpush1.msra.mxu0 0.0
    %109 = vmatprep.subr.mxu0 0.0
    %110 = vmatpush1.msra.mxu0 0.0
    %111 = vmatprep.subr.mxu0 0.0
    %112 = vmatpush1.msra.mxu0 0.0
    %113 = vmatprep.subr.mxu0 0.0
    %114 = vmatpush1.msra.mxu0 0.0
    %115 = vmatprep.subr.mxu0 0.0
    %116 = vmatpush1.msra.mxu0 0.0
    %117 = vmatprep.subr.mxu0 0.0
    %118 = vmatpush1.msra.mxu0 0.0
    %119 = vmatprep.subr.mxu0 0.0
    %120 = vmatpush1.msra.mxu0 0.0
    %121 = vmatprep.subr.mxu0 0.0
    %122 = vmatpush1.msra.mxu0 0.0
    %123 = vmatprep.mubr.f32.mxu0 0.0
    %124 = vmatmul.mubr.f32.gmra.mrb[0].mxu0 %v57
    %v125 = vpop.f32.mrb[0].mxu0
    %v126 = vadd.f32 0.0, %v125
    %v127 = vpop.f32.mrb[0].mxu0
    %v128 = vadd.f32 0.0, %v127
    %129 = vdwg.mxu0
    %130 = vmatprep.subr.mxu0 0.0
    %131 = vmatpush1.msra.mxu0 %v45
    %132 = vmatprep.subr.mxu0 0.0
    %133 = vmatpush1.msra.mxu0 %v48
    %134 = vmatprep.subr.mxu0 0.0
    %135 = vmatpush1.msra.mxu0 %v51
    %136 = vmatprep.subr.mxu0 0.0
    %137 = vmatpush1.msra.mxu0 %v54
    %138 = vmatprep.subr.mxu0 0.0
    %139 = vmatpush1.msra.mxu0 0.0
    %140 = vmatprep.subr.mxu0 0.0
    %141 = vmatpush1.msra.mxu0 0.0
    %142 = vmatprep.subr.mxu0 0.0
    %143 = vmatpush1.msra.mxu0 0.0
    %144 = vmatprep.subr.mxu0 0.0
    %145 = vmatpush1.msra.mxu0 0.0
    %146 = vmatprep.subr.mxu0 0.0
    %147 = vmatpush1.msra.mxu0 0.0
    %148 = vmatprep.subr.mxu0 0.0
    %149 = vmatpush1.msra.mxu0 0.0
    %150 = vmatprep.subr.mxu0 0.0
    %151 = vmatpush1.msra.mxu0 0.0
    %152 = vmatprep.subr.mxu0 0.0
    %153 = vmatpush1.msra.mxu0 0.0
    %154 = vmatprep.subr.mxu0 0.0
    %155 = vmatpush1.msra.mxu0 0.0
    %156 = vmatprep.subr.mxu0 0.0
    %157 = vmatpush1.msra.mxu0 0.0
    %158 = vmatprep.subr.mxu0 0.0
    %159 = vmatpush1.msra.mxu0 0.0
    %160 = vmatprep.subr.mxu0 0.0
    %161 = vmatpush1.msra.mxu0 0.0
    %162 = vmatprep.subr.mxu0 0.0
    %163 = vmatpush1.msra.mxu0 0.0
    %164 = vmatprep.subr.mxu0 0.0
    %165 = vmatpush1.msra.mxu0 0.0
    %166 = vmatprep.subr.mxu0 0.0
    %167 = vmatpush1.msra.mxu0 0.0
    %168 = vmatprep.subr.mxu0 0.0
    %169 = vmatpush1.msra.mxu0 0.0
    %170 = vmatprep.subr.mxu0 0.0
    %171 = vmatpush1.msra.mxu0 0.0
    %172 = vmatprep.subr.mxu0 0.0
    %173 = vmatpush1.msra.mxu0 0.0
    %174 = vmatprep.subr.mxu0 0.0
    %175 = vmatpush1.msra.mxu0 0.0
    %176 = vmatprep.subr.mxu0 0.0
    %177 = vmatpush1.msra.mxu0 0.0
    %178 = vmatprep.subr.mxu0 0.0
    %179 = vmatpush1.msra.mxu0 0.0
    %180 = vmatprep.subr.mxu0 0.0
    %181 = vmatpush1.msra.mxu0 0.0
    %182 = vmatprep.subr.mxu0 0.0
    %183 = vmatpush1.msra.mxu0 0.0
    %184 = vmatprep.subr.mxu0 0.0
    %185 = vmatpush1.msra.mxu0 0.0
    %186 = vmatprep.subr.mxu0 0.0
    %187 = vmatpush1.msra.mxu0 0.0
    %188 = vmatprep.subr.mxu0 0.0
    %189 = vmatpush1.msra.mxu0 0.0
    %190 = vmatprep.subr.mxu0 0.0
    %191 = vmatpush1.msra.mxu0 0.0
    %192 = vmatprep.subr.mxu0 0.0
    %193 = vmatpush1.msra.mxu0 0.0
    %194 = vmatprep.mubr.f32.mxu0 0.0
    %195 = vmatmul.mubr.f32.gmra.mrb[0].mxu0 %v57
    %v196 = vpop.f32.mrb[0].mxu0
    %v197 = vadd.f32 0.0, %v196
    %v198 = vpop.f32.mrb[0].mxu0
    %199 = vdwg.mxu0
    %v200 = vpack.c.bf16 %v126, %v126
    %201 = vst [vmem:[#allocation7] sm:$0xf] %v200
    %v202 = vpack.c.bf16 %v128, %v128
    %203 = vst [vmem:[#allocation8] sm:$0xf] %v202
    %v204 = vpack.c.bf16 %v197, %v197
    %205 = vst [vmem:[#allocation10] sm:$0xf] %v204
    // Predicated region
    $region18: #{tpu_custom_call.1} parent=1 // pred_check
      _
    $region19: #{tpu_custom_call.1} parent=1 // pred_check_branch
      %207 = sbr.rel (0) target = $region21
    $region20: #{tpu_custom_call.1} parent=1 // pred_region
      %s209 = ssub.s32 64, 64
      %210 = vsyncadd [#allocation4], %s209
      %s212 = sshll.u32 [#allocation7], 4
      %s213 = int_to_ptr.vmem [resolvable:$true] %s212
      %215 = dma.vmem_to_hbm [thread:$0]  %s213, 64, %s2, [#allocation4]
    $region21: #{tpu_custom_call.1} parent=1 // pred_fallthru
      _
    // Predicated region
    $region22: #{tpu_custom_call.1} parent=1 // pred_check
      _
    $region23: #{tpu_custom_call.1} parent=1 // pred_check_branch
      %217 = sbr.rel (0) target = $region25
    $region24: #{tpu_custom_call.1} parent=1 // pred_region
      %s219 = ssub.s32 64, 64
      %220 = vsyncadd [#allocation9], %s219
      %s222 = sshll.u32 [#allocation8], 4
      %s223 = int_to_ptr.vmem [resolvable:$true] %s222
      %225 = dma.vmem_to_hbm [thread:$0]  %s223, 64, %s3, [#allocation9]
    $region25: #{tpu_custom_call.1} parent=1 // pred_fallthru
      _
    // Predicated region
    $region26: #{tpu_custom_call.1} parent=1 // pred_check
      _
    $region27: #{tpu_custom_call.1} parent=1 // pred_check_branch
      %227 = sbr.rel (0) target = $region29
    $region28: #{tpu_custom_call.1} parent=1 // pred_region
      %s229 = ssub.s32 64, 64
      %230 = vsyncadd [#allocation9], %s229
      %s232 = sshll.u32 [#allocation10], 4
      %s233 = int_to_ptr.vmem [resolvable:$true] %s232
      %235 = dma.vmem_to_hbm [thread:$0]  %s233, 64, %s4, [#allocation9]
    $region29: #{tpu_custom_call.1} parent=1 // pred_fallthru
      _
    // Predicated region
    $region30: #{tpu_custom_call.1} parent=1 // pred_check
      _
    $region31: #{tpu_custom_call.1} parent=1 // pred_check_branch
      %237 = sbr.rel (0) target = $region33
    $region32: #{tpu_custom_call.1} parent=1 // pred_region
      %238 = dma.done [#allocation4], 64
    $region33: #{tpu_custom_call.1} parent=1 // pred_fallthru
      _
    // Predicated region
    $region34: #{tpu_custom_call.1} parent=1 // pred_check
      _
    $region35: #{tpu_custom_call.1} parent=1 // pred_check_branch
      %240 = sbr.rel (0) target = $region37
    $region36: #{tpu_custom_call.1} parent=1 // pred_region
      %241 = dma.done [#allocation9], 64
    $region37: #{tpu_custom_call.1} parent=1 // pred_fallthru
      _
    // Predicated region
    $region38: #{tpu_custom_call.1} parent=1 // pred_check
      _
    $region39: #{tpu_custom_call.1} parent=1 // pred_check_branch
      %243 = sbr.rel (0) target = $region41
    $region40: #{tpu_custom_call.1} parent=1 // pred_region
      %244 = dma.done [#allocation9], 64
    $region41: #{tpu_custom_call.1} parent=1 // pred_fallthru
      _
    %245 = vsyncpa [#allocation3], 1
    %246 = vsyncpa [#allocation6], 1
    %247 = vsyncpa [#allocation4], 1
    %248 = vsyncpa [#allocation9], 1

</llo_original>
